<compile_context>
chip_gen: v5e
topology: v5e:2x2
jax: 0.10.0
libtpu: 0.0.40
codegen_flags: <defaults>
</compile_context>

<pallas_src>
import functools

import jax
import jax.numpy as jnp
from jax.experimental import pallas as pl
from jax.experimental.pallas import tpu as pltpu

_SMOOTH = 1e-05


def _packed_kernel(score_ref, tgt_ref, out_ref,
                   inter_ref, ysum_ref, zsum_ref, *,
                   apply_softmax, n_classes, s_valid, s_tile, needs_mask,
                   approx_recip):
    """Pixels packed on (sublane, lane) = (s_tile, 128); classes are slabs.

    score_ref : (C, s_tile, 128)  input dtype
    tgt_ref   : (1, s_tile, 128)  int32
    out_ref   : (C, 3)            f32   [intersect, y_sum, z_sum] for this batch row
    *_ref     : (C, 128)          f32   per-class lane-partial accumulators
    """
    j = pl.program_id(1)

    @pl.when(j == 0)
    def _init():
        inter_ref[...] = jnp.zeros_like(inter_ref)
        ysum_ref[...] = jnp.zeros_like(ysum_ref)
        zsum_ref[...] = jnp.zeros_like(zsum_ref)

    def body(masked):
        tgt = tgt_ref[0]                                            # (s_tile, 128) int32
        slabs = [score_ref[i].astype(jnp.float32) for i in range(n_classes)]

        if masked:
            row = jax.lax.broadcasted_iota(jnp.int32, (s_tile, 128), 0)
            valid = (j * s_tile + row) < s_valid                    # (s_tile, 128) bool
            # where-masking (not multiply): the trailing block's OOB lanes are
            # undefined and could hold NaN/Inf.
            slabs = [jnp.where(valid, s, 0.0) for s in slabs]

        if apply_softmax:
            m = slabs[0]
            for i in range(1, n_classes):
                m = jnp.maximum(m, slabs[i])
            exps = [jnp.exp(s - m) for s in slabs]
            denom = exps[0]
            for i in range(1, n_classes):
                denom = denom + exps[i]
            if approx_recip:
                inv = pl.reciprocal(denom, approx=True)   # EUP slot; ~1e-3 rel. deviation
            else:
                inv = 1.0 / denom
            slabs = [e * inv for e in exps]
            if masked:
                slabs = [jnp.where(valid, s, 0.0) for s in slabs]

        inter_rows, ysum_rows, zsum_rows = [], [], []
        for i in range(n_classes):
            s_i = slabs[i]
            oh_i = tgt == i
            if masked:
                oh_i = jnp.logical_and(oh_i, valid)
            oh_i = oh_i.astype(jnp.float32)
            inter_rows.append(jnp.sum(s_i * oh_i, axis=0, keepdims=True))
            # onehot is 0/1 so sum(onehot) == sum(onehot * onehot)
            ysum_rows.append(jnp.sum(oh_i, axis=0, keepdims=True))
            zsum_rows.append(jnp.sum(s_i * s_i, axis=0, keepdims=True))
        inter_ref[...] += jnp.concatenate(inter_rows, axis=0)
        ysum_ref[...] += jnp.concatenate(ysum_rows, axis=0)
        zsum_ref[...] += jnp.concatenate(zsum_rows, axis=0)

    if needs_mask:
        is_last = j == pl.num_programs(1) - 1

        @pl.when(jnp.logical_not(is_last))
        def _unmasked():
            body(masked=False)

        @pl.when(is_last)
        def _masked():
            body(masked=True)
    else:
        body(masked=False)

    @pl.when(j == pl.num_programs(1) - 1)
    def _finalize():
        out_ref[...] = jnp.concatenate(
            [jnp.sum(inter_ref[...], axis=1, keepdims=True),
             jnp.sum(ysum_ref[...], axis=1, keepdims=True),
             jnp.sum(zsum_ref[...], axis=1, keepdims=True)], axis=1)


def _strided_kernel(score_ref, tgt_ref, out_ref,
                    inter_ref, ysum_ref, zsum_ref, *,
                    apply_softmax, n_valid, tile, needs_mask, approx_recip):
    """Fallback for H*W not a multiple of 128: classes on sublanes, pixels on lanes.

    score_ref : (C, tile)  input dtype
    tgt_ref   : (1, tile)  int32
    out_ref   : (C, 3)     f32
    *_ref     : (C, 1)     f32 accumulators
    """
    j = pl.program_id(1)

    @pl.when(j == 0)
    def _init():
        inter_ref[...] = jnp.zeros_like(inter_ref)
        ysum_ref[...] = jnp.zeros_like(ysum_ref)
        zsum_ref[...] = jnp.zeros_like(zsum_ref)

    def body(masked):
        score = score_ref[...].astype(jnp.float32)          # (C, tile)
        tgt = tgt_ref[...]                                  # (1, tile) int32

        if masked:
            lane = jax.lax.broadcasted_iota(jnp.int32, (1, tile), 1)
            valid = (j * tile + lane) < n_valid             # (1, tile) bool
            score = jnp.where(valid, score, 0.0)            # before exp: no NaN/Inf leaks

        if apply_softmax:
            m = jnp.max(score, axis=0, keepdims=True)
            e = jnp.exp(score - m)
            denom = jnp.sum(e, axis=0, keepdims=True)
            inv = pl.reciprocal(denom, approx=True) if approx_recip else 1.0 / denom
            score = e * inv
            if masked:
                score = jnp.where(valid, score, 0.0)

        class_ids = jax.lax.broadcasted_iota(jnp.int32, score.shape, 0)
        onehot = tgt == class_ids                           # (C, tile) bool
        if masked:
            onehot = jnp.logical_and(onehot, valid)
        onehot = onehot.astype(jnp.float32)

        inter_ref[...] += jnp.sum(score * onehot, axis=1, keepdims=True)
        ysum_ref[...] += jnp.sum(onehot, axis=1, keepdims=True)
        zsum_ref[...] += jnp.sum(score * score, axis=1, keepdims=True)

    if needs_mask:
        is_last = j == pl.num_programs(1) - 1

        @pl.when(jnp.logical_not(is_last))
        def _unmasked():
            body(masked=False)

        @pl.when(is_last)
        def _masked():
            body(masked=True)
    else:
        body(masked=False)

    @pl.when(j == pl.num_programs(1) - 1)
    def _finalize():
        out_ref[...] = jnp.concatenate(
            [inter_ref[...], ysum_ref[...], zsum_ref[...]], axis=1)


def _vmem_budget_bytes():
    # Per-generation input-tile budget (double-buffered inputs must fit in it).
    # v5e/v6e: 128 MiB physical -> cap at 24 MiB; v7x: 64 MiB physical -> ~21 MiB.
    try:
        cap = pltpu.get_tpu_info().vmem_capacity_bytes
    except Exception:
        cap = 64 * 1024 * 1024      # conservative (v7x per-core VMEM)
    return int(min(cap // 3, 24 * 1024 * 1024))


def dice_loss(inputs, target, weight=None, softmax=False, approx_recip=True):
    """inputs: (B, C, H, W) float (f32/bf16); target: (B, H, W) int class labels."""
    B, C, H, W = inputs.shape
    if target.shape != (B, H, W):
        raise TypeError(
            f"Predict shape {inputs.shape} and target {target.shape} do not match")

    hw = H * W
    in_bytes = jnp.dtype(inputs.dtype).itemsize
    budget = _vmem_budget_bytes()

    # Free reshapes only -- no HBM transpose, no pad, no dtype cast of the big array.
    score = inputs.reshape(B, C, hw)
    tgt = target.reshape(B, 1, hw).astype(jnp.int32)

    if hw % 128 == 0:
        # Packed layout: pixels fill both sublanes and lanes of every vreg; the
        # class axis becomes separate slabs (key when C < 8, f32 / C < 16, bf16).
        S = hw // 128
        bytes_per_row = 128 * (C * in_bytes + 4)          # score row (all classes) + tgt row
        s_cap = max(8, budget // (2 * bytes_per_row))     # double-buffered inputs
        if S <= s_cap:
            s_tile = S                                    # full-dim block, no masking
        else:
            s_tile = (s_cap // 8) * 8
        num_tiles = int(pl.cdiv(S, s_tile))
        needs_mask = num_tiles * s_tile != S

        score = score.reshape(B, C, S, 128)
        tgt = tgt.reshape(B, 1, S, 128)

        kernel = functools.partial(
            _packed_kernel, apply_softmax=softmax, n_classes=C, s_valid=S,
            s_tile=s_tile, needs_mask=needs_mask, approx_recip=approx_recip)
        in_specs = [
            pl.BlockSpec((None, C, s_tile, 128), lambda b, j: (b, 0, j, 0)),
            pl.BlockSpec((None, 1, s_tile, 128), lambda b, j: (b, 0, j, 0)),
        ]
        scratch = [pltpu.VMEM((C, 128), jnp.float32)] * 3
        block_bytes = s_tile * bytes_per_row
    else:
        # Lane-strided fallback: classes on sublanes, pixels on lanes; the
        # trailing partial tile is masked in-kernel (no jnp.pad / extra HBM pass).
        per_lane_bytes = C * in_bytes + 4
        lane_cap = max(128, ((budget // (2 * per_lane_bytes)) // 128) * 128)
        if hw < 128:
            tile = hw                                     # full-dim block
        else:
            tile = min(lane_cap, (hw // 128) * 128)
        num_tiles = int(pl.cdiv(hw, tile))
        needs_mask = num_tiles * tile != hw

        kernel = functools.partial(
            _strided_kernel, apply_softmax=softmax, n_valid=hw, tile=tile,
            needs_mask=needs_mask, approx_recip=approx_recip)
        in_specs = [
            pl.BlockSpec((None, C, tile), lambda b, j: (b, 0, j)),
            pl.BlockSpec((None, 1, tile), lambda b, j: (b, 0, j)),
        ]
        scratch = [pltpu.VMEM((C, 1), jnp.float32)] * 3
        block_bytes = tile * per_lane_bytes

    # Raise the scoped VMEM limit to cover the double-buffered tiles (+ headroom),
    # but never past v7x's 64 MiB physical VMEM.
    vmem_limit = int(min(64 << 20, max(32 << 20, 2 * block_bytes + (8 << 20))))

    stats = pl.pallas_call(
        kernel,
        out_shape=jax.ShapeDtypeStruct((B, C, 3), jnp.float32),
        grid_spec=pltpu.PrefetchScalarGridSpec(
            num_scalar_prefetch=0,
            grid=(B, num_tiles),
            in_specs=in_specs,
            out_specs=pl.BlockSpec((None, C, 3), lambda b, j: (b, 0, 0)),
            scratch_shapes=scratch,
        ),
        compiler_params=pltpu.CompilerParams(
            dimension_semantics=("parallel", "arbitrary"),
            vmem_limit_bytes=vmem_limit),
    )(score, tgt)

    # Tiny O(C) dice combine in plain JAX (sums over the whole batch per class,
    # exactly like the PyTorch module).
    per_class = jnp.sum(stats, axis=0)                    # (C, 3)
    intersect = per_class[:, 0]
    y_sum = per_class[:, 1]
    z_sum = per_class[:, 2]
    dice = 1.0 - (2.0 * intersect + _SMOOTH) / (z_sum + y_sum + _SMOOTH)
    if weight is None:
        w = jnp.ones((C,), jnp.float32)
    else:
        w = jnp.asarray(weight, jnp.float32).reshape(C)
    return jnp.sum(dice * w) / jnp.float32(C)


def _dice_loss_ref(inputs, target, weight=None, softmax=False):
    """Pure-JAX reference mirroring the PyTorch module."""
    B, C, H, W = inputs.shape
    x = inputs.astype(jnp.float32)
    if softmax:
        x = jax.nn.softmax(x, axis=1)
    onehot = (target[:, None, :, :] == jnp.arange(C)[None, :, None, None]).astype(jnp.float32)
    if weight is None:
        weight = [1.0] * C
    loss = 0.0
    for i in range(C):
        s = x[:, i]
        t = onehot[:, i]
        intersect = jnp.sum(s * t)
        y_sum = jnp.sum(t * t)
        z_sum = jnp.sum(s * s)
        dice = 1.0 - (2.0 * intersect + _SMOOTH) / (z_sum + y_sum + _SMOOTH)
        loss = loss + dice * weight[i]
    return loss / C


if __name__ == "__main__":
    key = jax.random.PRNGKey(0)

    # Case 1: softmax path, lane-aligned spatial size -> packed (pixels-on-sublanes) kernel.
    k1, k2 = jax.random.split(key)
    B, C, H, W = 2, 4, 16, 16
    inputs = jax.random.normal(k1, (B, C, H, W), dtype=jnp.float32)
    target = jax.random.randint(k2, (B, H, W), 0, C, dtype=jnp.int32)

    out = dice_loss(inputs, target, weight=None, softmax=True)
    out = jax.block_until_ready(out)
    ref = _dice_loss_ref(inputs, target, weight=None, softmax=True)
    assert jnp.allclose(out, ref, atol=2e-3, rtol=2e-3), (out, ref)

    # Case 2: no softmax, per-class weights, non-128-divisible spatial size ->
    # lane-strided fallback with in-kernel masking of the trailing partial tile.
    k3, k4 = jax.random.split(k1)
    B2, C2, H2, W2 = 2, 4, 13, 13
    inputs2 = jax.nn.sigmoid(jax.random.normal(k3, (B2, C2, H2, W2), dtype=jnp.float32))
    target2 = jax.random.randint(k4, (B2, H2, W2), 0, C2, dtype=jnp.int32)
    wts = [1.0, 2.0, 0.5, 1.5]

    out2 = dice_loss(inputs2, target2, weight=wts, softmax=False)
    out2 = jax.block_until_ready(out2)
    ref2 = _dice_loss_ref(inputs2, target2, weight=wts, softmax=False)
    assert jnp.allclose(out2, ref2, atol=2e-3, rtol=2e-3), (out2, ref2)

    print("KERNEL_OK")
</pallas_src>

<mosaic_0001>
module attributes {stable_mosaic.version = 11 : i64} {
  func.func @_packed_kernel(%arg0: i32, %arg1: i32, %arg2: memref<1x4x2x128xf32, #tpu.memory_space<vmem>>, %arg3: memref<1x1x2x128xi32, #tpu.memory_space<vmem>>, %arg4: memref<1x4x3xf32, #tpu.memory_space<vmem>>, %arg5: memref<4x128xf32, #tpu.memory_space<vmem>>, %arg6: memref<4x128xf32, #tpu.memory_space<vmem>>, %arg7: memref<4x128xf32, #tpu.memory_space<vmem>>) attributes {dimension_semantics = [#tpu.dimension_semantics<parallel>, #tpu.dimension_semantics<arbitrary>], iteration_bounds = array<i64: 2, 1>, scalar_prefetch = 0 : i64, scratch_operands = 3 : i64, tpu.core_type = #tpu.core_type<tc>, window_params = [{transform_indices = @transform_0, window_bounds = array<i64: 1, 4, 2, 128>}, {transform_indices = @transform_1, window_bounds = array<i64: 1, 1, 2, 128>}, {transform_indices = @transform_2, window_bounds = array<i64: 1, 4, 3>}]} {
    %c0_i32 = arith.constant 0 : i32
    %0 = arith.cmpi eq, %arg1, %c0_i32 : i32
    %1 = arith.extui %0 : i1 to i32
    %c0_i32_0 = arith.constant 0 : i32
    %2 = arith.cmpi ne, %1, %c0_i32_0 : i32
    scf.if %2 {
      %cst_43 = arith.constant 0.000000e+00 : f32
      %95 = vector.broadcast %cst_43 : f32 to vector<4x128xf32>
      %c0_44 = arith.constant 0 : index
      %c0_45 = arith.constant 0 : index
      %96 = vector.load %arg5[%c0_44, %c0_45] : memref<4x128xf32, #tpu.memory_space<vmem>>, vector<4x128xf32>
      tpu.vector_store %arg5[%c0_44, %c0_45], %95 {strides = array<i32>} : memref<4x128xf32, #tpu.memory_space<vmem>>, vector<4x128xf32>,
      %cst_46 = arith.constant 0.000000e+00 : f32
      %97 = vector.broadcast %cst_46 : f32 to vector<4x128xf32>
      %c0_47 = arith.constant 0 : index
      %c0_48 = arith.constant 0 : index
      %98 = vector.load %arg6[%c0_47, %c0_48] : memref<4x128xf32, #tpu.memory_space<vmem>>, vector<4x128xf32>
      tpu.vector_store %arg6[%c0_47, %c0_48], %97 {strides = array<i32>} : memref<4x128xf32, #tpu.memory_space<vmem>>, vector<4x128xf32>,
      %cst_49 = arith.constant 0.000000e+00 : f32
      %99 = vector.broadcast %cst_49 : f32 to vector<4x128xf32>
      %c0_50 = arith.constant 0 : index
      %c0_51 = arith.constant 0 : index
      %100 = vector.load %arg7[%c0_50, %c0_51] : memref<4x128xf32, #tpu.memory_space<vmem>>, vector<4x128xf32>
      tpu.vector_store %arg7[%c0_50, %c0_51], %99 {strides = array<i32>} : memref<4x128xf32, #tpu.memory_space<vmem>>, vector<4x128xf32>,
    } else {
    }
    %c0 = arith.constant 0 : index
    %c0_1 = arith.constant 0 : index
    %c0_2 = arith.constant 0 : index
    %c0_3 = arith.constant 0 : index
    %3 = vector.load %arg3[%c0, %c0_1, %c0_2, %c0_3] : memref<1x1x2x128xi32, #tpu.memory_space<vmem>>, vector<1x1x2x128xi32>
    %4 = vector.shape_cast %3 : vector<1x1x2x128xi32> to vector<2x128xi32>
    %c0_4 = arith.constant 0 : index
    %c0_5 = arith.constant 0 : index
    %c0_6 = arith.constant 0 : index
    %c0_7 = arith.constant 0 : index
    %5 = vector.load %arg2[%c0_4, %c0_5, %c0_6, %c0_7] : memref<1x4x2x128xf32, #tpu.memory_space<vmem>>, vector<1x1x2x128xf32>
    %6 = vector.shape_cast %5 : vector<1x1x2x128xf32> to vector<2x128xf32>
    %c0_8 = arith.constant 0 : index
    %c1 = arith.constant 1 : index
    %c0_9 = arith.constant 0 : index
    %c0_10 = arith.constant 0 : index
    %7 = vector.load %arg2[%c0_8, %c1, %c0_9, %c0_10] : memref<1x4x2x128xf32, #tpu.memory_space<vmem>>, vector<1x1x2x128xf32>
    %8 = vector.shape_cast %7 : vector<1x1x2x128xf32> to vector<2x128xf32>
    %c0_11 = arith.constant 0 : index
    %c2 = arith.constant 2 : index
    %c0_12 = arith.constant 0 : index
    %c0_13 = arith.constant 0 : index
    %9 = vector.load %arg2[%c0_11, %c2, %c0_12, %c0_13] : memref<1x4x2x128xf32, #tpu.memory_space<vmem>>, vector<1x1x2x128xf32>
    %10 = vector.shape_cast %9 : vector<1x1x2x128xf32> to vector<2x128xf32>
    %c0_14 = arith.constant 0 : index
    %c3 = arith.constant 3 : index
    %c0_15 = arith.constant 0 : index
    %c0_16 = arith.constant 0 : index
    %11 = vector.load %arg2[%c0_14, %c3, %c0_15, %c0_16] : memref<1x4x2x128xf32, #tpu.memory_space<vmem>>, vector<1x1x2x128xf32>
    %12 = vector.shape_cast %11 : vector<1x1x2x128xf32> to vector<2x128xf32>
    %13 = arith.maximumf %6, %8 : vector<2x128xf32>
    %14 = arith.maximumf %13, %10 : vector<2x128xf32>
    %15 = arith.maximumf %14, %12 : vector<2x128xf32>
    %16 = arith.subf %6, %15 : vector<2x128xf32>
    %17 = math.exp %16 : vector<2x128xf32>
    %18 = arith.subf %8, %15 : vector<2x128xf32>
    %19 = math.exp %18 : vector<2x128xf32>
    %20 = arith.subf %10, %15 : vector<2x128xf32>
    %21 = math.exp %20 : vector<2x128xf32>
    %22 = arith.subf %12, %15 : vector<2x128xf32>
    %23 = math.exp %22 : vector<2x128xf32>
    %24 = arith.addf %17, %19 : vector<2x128xf32>
    %25 = arith.addf %24, %21 : vector<2x128xf32>
    %26 = arith.addf %25, %23 : vector<2x128xf32>
    %27 = tpu.reciprocal %26 {approx = true} : vector<2x128xf32> -> vector<2x128xf32>
    %28 = arith.mulf %17, %27 : vector<2x128xf32>
    %29 = arith.mulf %19, %27 : vector<2x128xf32>
    %30 = arith.mulf %21, %27 : vector<2x128xf32>
    %31 = arith.mulf %23, %27 : vector<2x128xf32>
    %c0_i32_17 = arith.constant 0 : i32
    %32 = vector.broadcast %c0_i32_17 : i32 to vector<2x128xi32>
    %33 = arith.cmpi eq, %4, %32 : vector<2x128xi32>
    %34 = arith.extui %33 : vector<2x128xi1> to vector<2x128xi32>
    %35 = arith.sitofp %34 : vector<2x128xi32> to vector<2x128xf32>
    %36 = arith.mulf %28, %35 : vector<2x128xf32>
    %cst = arith.constant dense<0.000000e+00> : vector<128xf32>
    %37 = vector.multi_reduction <add>, %36, %cst [0] : vector<2x128xf32> to vector<128xf32>
    %38 = vector.shape_cast %37 : vector<128xf32> to vector<1x128xf32>
    %cst_18 = arith.constant dense<0.000000e+00> : vector<128xf32>
    %39 = vector.multi_reduction <add>, %35, %cst_18 [0] : vector<2x128xf32> to vector<128xf32>
    %40 = vector.shape_cast %39 : vector<128xf32> to vector<1x128xf32>
    %41 = arith.mulf %28, %28 : vector<2x128xf32>
    %cst_19 = arith.constant dense<0.000000e+00> : vector<128xf32>
    %42 = vector.multi_reduction <add>, %41, %cst_19 [0] : vector<2x128xf32> to vector<128xf32>
    %43 = vector.shape_cast %42 : vector<128xf32> to vector<1x128xf32>
    %c1_i32 = arith.constant 1 : i32
    %44 = vector.broadcast %c1_i32 : i32 to vector<2x128xi32>
    %45 = arith.cmpi eq, %4, %44 : vector<2x128xi32>
    %46 = arith.extui %45 : vector<2x128xi1> to vector<2x128xi32>
    %47 = arith.sitofp %46 : vector<2x128xi32> to vector<2x128xf32>
    %48 = arith.mulf %29, %47 : vector<2x128xf32>
    %cst_20 = arith.constant dense<0.000000e+00> : vector<128xf32>
    %49 = vector.multi_reduction <add>, %48, %cst_20 [0] : vector<2x128xf32> to vector<128xf32>
    %50 = vector.shape_cast %49 : vector<128xf32> to vector<1x128xf32>
    %cst_21 = arith.constant dense<0.000000e+00> : vector<128xf32>
    %51 = vector.multi_reduction <add>, %47, %cst_21 [0] : vector<2x128xf32> to vector<128xf32>
    %52 = vector.shape_cast %51 : vector<128xf32> to vector<1x128xf32>
    %53 = arith.mulf %29, %29 : vector<2x128xf32>
    %cst_22 = arith.constant dense<0.000000e+00> : vector<128xf32>
    %54 = vector.multi_reduction <add>, %53, %cst_22 [0] : vector<2x128xf32> to vector<128xf32>
    %55 = vector.shape_cast %54 : vector<128xf32> to vector<1x128xf32>
    %c2_i32 = arith.constant 2 : i32
    %56 = vector.broadcast %c2_i32 : i32 to vector<2x128xi32>
    %57 = arith.cmpi eq, %4, %56 : vector<2x128xi32>
    %58 = arith.extui %57 : vector<2x128xi1> to vector<2x128xi32>
    %59 = arith.sitofp %58 : vector<2x128xi32> to vector<2x128xf32>
    %60 = arith.mulf %30, %59 : vector<2x128xf32>
    %cst_23 = arith.constant dense<0.000000e+00> : vector<128xf32>
    %61 = vector.multi_reduction <add>, %60, %cst_23 [0] : vector<2x128xf32> to vector<128xf32>
    %62 = vector.shape_cast %61 : vector<128xf32> to vector<1x128xf32>
    %cst_24 = arith.constant dense<0.000000e+00> : vector<128xf32>
    %63 = vector.multi_reduction <add>, %59, %cst_24 [0] : vector<2x128xf32> to vector<128xf32>
    %64 = vector.shape_cast %63 : vector<128xf32> to vector<1x128xf32>
    %65 = arith.mulf %30, %30 : vector<2x128xf32>
    %cst_25 = arith.constant dense<0.000000e+00> : vector<128xf32>
    %66 = vector.multi_reduction <add>, %65, %cst_25 [0] : vector<2x128xf32> to vector<128xf32>
    %67 = vector.shape_cast %66 : vector<128xf32> to vector<1x128xf32>
    %c3_i32 = arith.constant 3 : i32
    %68 = vector.broadcast %c3_i32 : i32 to vector<2x128xi32>
    %69 = arith.cmpi eq, %4, %68 : vector<2x128xi32>
    %70 = arith.extui %69 : vector<2x128xi1> to vector<2x128xi32>
    %71 = arith.sitofp %70 : vector<2x128xi32> to vector<2x128xf32>
    %72 = arith.mulf %31, %71 : vector<2x128xf32>
    %cst_26 = arith.constant dense<0.000000e+00> : vector<128xf32>
    %73 = vector.multi_reduction <add>, %72, %cst_26 [0] : vector<2x128xf32> to vector<128xf32>
    %74 = vector.shape_cast %73 : vector<128xf32> to vector<1x128xf32>
    %cst_27 = arith.constant dense<0.000000e+00> : vector<128xf32>
    %75 = vector.multi_reduction <add>, %71, %cst_27 [0] : vector<2x128xf32> to vector<128xf32>
    %76 = vector.shape_cast %75 : vector<128xf32> to vector<1x128xf32>
    %77 = arith.mulf %31, %31 : vector<2x128xf32>
    %cst_28 = arith.constant dense<0.000000e+00> : vector<128xf32>
    %78 = vector.multi_reduction <add>, %77, %cst_28 [0] : vector<2x128xf32> to vector<128xf32>
    %79 = vector.shape_cast %78 : vector<128xf32> to vector<1x128xf32>
    %c0_29 = arith.constant 0 : index
    %c0_30 = arith.constant 0 : index
    %80 = vector.load %arg5[%c0_29, %c0_30] : memref<4x128xf32, #tpu.memory_space<vmem>>, vector<4x128xf32>
    %81 = tpu.concatenate %38, %50, %62, %74 in 0 : vector<1x128xf32>, vector<1x128xf32>, vector<1x128xf32>, vector<1x128xf32> -> vector<4x128xf32>
    %82 = arith.addf %80, %81 : vector<4x128xf32>
    %c0_31 = arith.constant 0 : index
    %c0_32 = arith.constant 0 : index
    %83 = vector.load %arg5[%c0_31, %c0_32] : memref<4x128xf32, #tpu.memory_space<vmem>>, vector<4x128xf32>
    tpu.vector_store %arg5[%c0_31, %c0_32], %82 {strides = array<i32>} : memref<4x128xf32, #tpu.memory_space<vmem>>, vector<4x128xf32>,
    %c0_33 = arith.constant 0 : index
    %c0_34 = arith.constant 0 : index
    %84 = vector.load %arg6[%c0_33, %c0_34] : memref<4x128xf32, #tpu.memory_space<vmem>>, vector<4x128xf32>
    %85 = tpu.concatenate %40, %52, %64, %76 in 0 : vector<1x128xf32>, vector<1x128xf32>, vector<1x128xf32>, vector<1x128xf32> -> vector<4x128xf32>
    %86 = arith.addf %84, %85 : vector<4x128xf32>
    %c0_35 = arith.constant 0 : index
    %c0_36 = arith.constant 0 : index
    %87 = vector.load %arg6[%c0_35, %c0_36] : memref<4x128xf32, #tpu.memory_space<vmem>>, vector<4x128xf32>
    tpu.vector_store %arg6[%c0_35, %c0_36], %86 {strides = array<i32>} : memref<4x128xf32, #tpu.memory_space<vmem>>, vector<4x128xf32>,
    %c0_37 = arith.constant 0 : index
    %c0_38 = arith.constant 0 : index
    %88 = vector.load %arg7[%c0_37, %c0_38] : memref<4x128xf32, #tpu.memory_space<vmem>>, vector<4x128xf32>
    %89 = tpu.concatenate %43, %55, %67, %79 in 0 : vector<1x128xf32>, vector<1x128xf32>, vector<1x128xf32>, vector<1x128xf32> -> vector<4x128xf32>
    %90 = arith.addf %88, %89 : vector<4x128xf32>
    %c0_39 = arith.constant 0 : index
    %c0_40 = arith.constant 0 : index
    %91 = vector.load %arg7[%c0_39, %c0_40] : memref<4x128xf32, #tpu.memory_space<vmem>>, vector<4x128xf32>
    tpu.vector_store %arg7[%c0_39, %c0_40], %90 {strides = array<i32>} : memref<4x128xf32, #tpu.memory_space<vmem>>, vector<4x128xf32>,
    %c0_i32_41 = arith.constant 0 : i32
    %92 = arith.cmpi eq, %arg1, %c0_i32_41 : i32
    %93 = arith.extui %92 : i1 to i32
    %c0_i32_42 = arith.constant 0 : i32
    %94 = arith.cmpi ne, %93, %c0_i32_42 : i32
    scf.if %94 {
      %c0_43 = arith.constant 0 : index
      %c0_44 = arith.constant 0 : index
      %95 = vector.load %arg5[%c0_43, %c0_44] : memref<4x128xf32, #tpu.memory_space<vmem>>, vector<4x128xf32>
      %cst_45 = arith.constant dense<0.000000e+00> : vector<4xf32>
      %96 = vector.multi_reduction <add>, %95, %cst_45 [1] : vector<4x128xf32> to vector<4xf32>
      %97 = vector.shape_cast %96 : vector<4xf32> to vector<4x1xf32>
      %c0_46 = arith.constant 0 : index
      %c0_47 = arith.constant 0 : index
      %98 = vector.load %arg6[%c0_46, %c0_47] : memref<4x128xf32, #tpu.memory_space<vmem>>, vector<4x128xf32>
      %cst_48 = arith.constant dense<0.000000e+00> : vector<4xf32>
      %99 = vector.multi_reduction <add>, %98, %cst_48 [1] : vector<4x128xf32> to vector<4xf32>
      %100 = vector.shape_cast %99 : vector<4xf32> to vector<4x1xf32>
      %c0_49 = arith.constant 0 : index
      %c0_50 = arith.constant 0 : index
      %101 = vector.load %arg7[%c0_49, %c0_50] : memref<4x128xf32, #tpu.memory_space<vmem>>, vector<4x128xf32>
      %cst_51 = arith.constant dense<0.000000e+00> : vector<4xf32>
      %102 = vector.multi_reduction <add>, %101, %cst_51 [1] : vector<4x128xf32> to vector<4xf32>
      %103 = vector.shape_cast %102 : vector<4xf32> to vector<4x1xf32>
      %104 = tpu.concatenate %97, %100, %103 in 1 : vector<4x1xf32>, vector<4x1xf32>, vector<4x1xf32> -> vector<4x3xf32>
      %c0_52 = arith.constant 0 : index
      %c0_53 = arith.constant 0 : index
      %c0_54 = arith.constant 0 : index
      %105 = vector.load %arg4[%c0_52, %c0_53, %c0_54] : memref<1x4x3xf32, #tpu.memory_space<vmem>>, vector<1x4x3xf32>
      %106 = vector.shape_cast %105 : vector<1x4x3xf32> to vector<4x3xf32>
      %107 = vector.shape_cast %104 : vector<4x3xf32> to vector<1x4x3xf32>
      tpu.vector_store %arg4[%c0_52, %c0_53, %c0_54], %107 {strides = array<i32>} : memref<1x4x3xf32, #tpu.memory_space<vmem>>, vector<1x4x3xf32>,
    } else {
    }
    return
  }
  func.func @transform_0(%arg0: i32, %arg1: i32) -> (i32, i32, i32, i32) {
    %c0_i32 = arith.constant 0 : i32
    %c0_i32_0 = arith.constant 0 : i32
    %c0_i32_1 = arith.constant 0 : i32
    return %arg0, %c0_i32, %arg1, %c0_i32_0 : i32, i32, i32, i32
  }
  func.func @transform_1(%arg0: i32, %arg1: i32) -> (i32, i32, i32, i32) {
    %c0_i32 = arith.constant 0 : i32
    %c0_i32_0 = arith.constant 0 : i32
    %c0_i32_1 = arith.constant 0 : i32
    return %arg0, %c0_i32, %arg1, %c0_i32_0 : i32, i32, i32, i32
  }
  func.func @transform_2(%arg0: i32, %arg1: i32) -> (i32, i32, i32) {
    %c0_i32 = arith.constant 0 : i32
    %c0_i32_0 = arith.constant 0 : i32
    %c0_i32_1 = arith.constant 0 : i32
    return %arg0, %c0_i32, %c0_i32_0 : i32, i32, i32
  }
}

</mosaic_0001>

<llo_original>
// kernel: tpu_custom_call.1
$region0: #{tpu_custom_call.1}
  #allocation0 [shape = 'u32[]', space=smem, size = 0x4, offset = 0x4, fixed_abs, tag = 'smem constant byte address 0x4 - core index']
  #allocation1 [shape = 'u32[72,128]{1,0:T(1,128)}', space=vmem, size = 0x9000, scoped, tag = 'internal scratch']
  #allocation2 [shape = 'f32[4,128]{1,0:T(4,128)}', space=vmem, size = 0x800, scoped, tag = 'scratch operand']
  #allocation3 [shape = 'f32[4,128]{1,0:T(4,128)}', space=vmem, size = 0x800, scoped, tag = 'scratch operand']
  #allocation4 [shape = 'f32[4,128]{1,0:T(4,128)}', space=vmem, size = 0x800, scoped, tag = 'scratch operand']
  %s0 = inlined_call_operand.hbm [shape: f32[2,4,2,128], index: 0, kind: input, shape index: {}]
  %s1 = inlined_call_operand.hbm [shape: s32[2,1,2,128], index: 1, kind: input, shape index: {}]
  %s2 = inlined_call_operand.vmem [shape: f32[2,4,3], index: 2, kind: output, shape index: {}]
  %s3 = sld [smem:[#allocation0]]
  $region57: #{tpu_custom_call.1} parent=0
    _
  %s5 = ssub.s32 1, %s3
  %s6 = scalar_select 0, %s5, %s3
  $region1: #{tpu_custom_call.1} parent=0
    #allocation5 [shape = 'u8[8192]{0}', space=vmem, size = 0x2000, scoped, tag = 'input window, operand 0']
    #allocation6 [shape = 's32[2]{0}', space=sflag, size = 0x8, scoped, tag = 'scoped memory for tpu_custom_call.1']
    #allocation7 [shape = 'u8[2048]{0}', space=vmem, size = 0x800, scoped, tag = 'input window, operand 1']
    #allocation8 [shape = 's32[2]{0}', space=sflag, size = 0x8, scoped, tag = 'scoped memory for tpu_custom_call.1']
    %7 = vsyncpa [#allocation6], 0
    %s8 = scalar_lea.sflag [#allocation6], 1
    %9 = vsyncpa %s8, 0
    %10 = vsyncpa [#allocation8], 0
    %s11 = scalar_lea.sflag [#allocation8], 1
    %12 = vsyncpa %s11, 0
    loop: start=0, step=1, limit=4
    $region2: #{tpu_custom_call.1} parent=1 // loop_pre_header
      _
    $region3: #{tpu_custom_call.1} parent=1 // loop_header
      %s14 = sphi 0, %s18
      %p15 = scmp.ge.s32.totalorder %s14, 4
      %s21 = sphi 0, %s33
      %s22 = sphi 0, %s29
      %s23 = sphi 0, %s21
      %s24 = sphi 0, %s22
      %s25 = sphi 0, %s23
      %s26 = sphi 0, %s24
      %s38 = sphi 0, %s40
      %s41 = sphi 0, %s38
      %s42 = sphi 0, %s41
      %s58 = sphi 0, %s42
      %s66 = sphi 0, %s68
      %s69 = sphi 0, %s66
      %s70 = sphi 0, %s69
      %s86 = sphi 0, %s70
      %s92 = sphi 0, %s94
      %s95 = sphi 0, %s92
      %s96 = sphi 0, %s95
      %s112 = sphi 0, %s96
    $region4: #{tpu_custom_call.1} parent=1 // loop_header_branch
      %17 = sbr.rel (%p15) target = $region8
    $region5: #{tpu_custom_call.1} parent=1 // loop_body
      %s19 = ssub.s32 %s14, 1
      %s20 = ssub.s32 %s14, 2
      %s27 = sadd.s32 1, %s22
      %p28 = scmp.ge.s32.totalorder %s27, 1
      %s29 = scalar_select %p28, 0, %s27
      %s30 = sadd.s32 1, %s21
      %s31 = scalar_select %p28, %s30, %s21
      %p32 = scmp.ge.s32.totalorder %s31, 2
      %s33 = scalar_select %p32, 0, %s31
      %s34 = ssub.s32 %s21, %s33
      %s35 = ssub.s32 %s22, %s29
      %s36 = sor.u32 %s34, %s35
      %p37 = scmp.eq.s32.totalorder %s36, 0
      %s39 = sadd.s32 %s38, 1
      %s40 = scalar_select %p37, %s38, %s39
      %p43 = pneg %p37
      %p44 = scmp.eq.s32.totalorder %s14, 1
      %p45 = por %p43, %p44
      %p46 = scmp.ne.s32.totalorder %s38, %s41
      %p47 = scmp.eq.s32.totalorder %s14, 0
      %p48 = por %p46, %p47
      %p49 = scmp.ne.s32.totalorder %s38, %s41
      %p50 = scmp.eq.s32.totalorder %s19, 1
      %p51 = por %p49, %p50
      %p52 = scmp.ne.s32.totalorder %s41, %s42
      %p53 = scmp.eq.s32.totalorder %s19, 0
      %p54 = por %p52, %p53
      %p55 = scmp.ne.s32.totalorder %s41, %s42
      %p56 = scmp.eq.s32.totalorder %s20, 1
      %p57 = por %p55, %p56
      %p59 = scmp.ne.s32.totalorder %s42, %s58
      %p60 = scmp.eq.s32.totalorder %s20, 0
      %p61 = por %p59, %p60
      %s62 = ssub.s32 %s21, %s33
      %s63 = ssub.s32 %s22, %s29
      %s64 = sor.u32 %s62, %s63
      %p65 = scmp.eq.s32.totalorder %s64, 0
      %s67 = sadd.s32 %s66, 1
      %s68 = scalar_select %p65, %s66, %s67
      %p71 = pneg %p65
      %p72 = scmp.eq.s32.totalorder %s14, 1
      %p73 = por %p71, %p72
      %p74 = scmp.ne.s32.totalorder %s66, %s69
      %p75 = scmp.eq.s32.totalorder %s14, 0
      %p76 = por %p74, %p75
      %p77 = scmp.ne.s32.totalorder %s66, %s69
      %p78 = scmp.eq.s32.totalorder %s19, 1
      %p79 = por %p77, %p78
      %p80 = scmp.ne.s32.totalorder %s69, %s70
      %p81 = scmp.eq.s32.totalorder %s19, 0
      %p82 = por %p80, %p81
      %p83 = scmp.ne.s32.totalorder %s69, %s70
      %p84 = scmp.eq.s32.totalorder %s20, 1
      %p85 = por %p83, %p84
      %p87 = scmp.ne.s32.totalorder %s70, %s86
      %p88 = scmp.eq.s32.totalorder %s20, 0
      %p89 = por %p87, %p88
      %s90 = ssub.s32 %s21, %s33
      %p91 = scmp.eq.s32.totalorder %s90, 0
      %s93 = sadd.s32 %s92, 1
      %s94 = scalar_select %p91, %s92, %s93
      %p97 = pneg %p91
      %p98 = scmp.eq.s32.totalorder %s14, 1
      %p99 = por %p97, %p98
      %p100 = scmp.ne.s32.totalorder %s92, %s95
      %p101 = scmp.eq.s32.totalorder %s14, 0
      %p102 = por %p100, %p101
      %p103 = scmp.ne.s32.totalorder %s92, %s95
      %p104 = scmp.eq.s32.totalorder %s19, 1
      %p105 = por %p103, %p104
      %p106 = scmp.ne.s32.totalorder %s95, %s96
      %p107 = scmp.eq.s32.totalorder %s19, 0
      %p108 = por %p106, %p107
      %p109 = scmp.ne.s32.totalorder %s95, %s96
      %p110 = scmp.eq.s32.totalorder %s20, 1
      %p111 = por %p109, %p110
      %p113 = scmp.ne.s32.totalorder %s96, %s112
      %p114 = scmp.eq.s32.totalorder %s20, 0
      %p115 = por %p113, %p114
      %p116 = scmp.le.s32.totalorder 1, %s14
      %p117 = scmp.lt.s32.totalorder %s14, 3
      %p118 = pnand %p116, %p117
      %p119 = pneg %p118
      // Predicated region
      $region9: #{tpu_custom_call.1} parent=5 // pred_check
        _
      $region10: #{tpu_custom_call.1} parent=5 // pred_check_branch
        %121 = sbr.rel (%p118) target = $region12
      $region11: #{tpu_custom_call.1} parent=5 // pred_region
        %s122 = ssub.s32 %s14, 1
      $region12: #{tpu_custom_call.1} parent=5 // pred_fallthru
        _
      %p123 = scmp.lt.s32.totalorder %s14, 2
      // Predicated region
      $region13: #{tpu_custom_call.1} parent=5 // pred_check
        %p124 = pneg %p123
      $region14: #{tpu_custom_call.1} parent=5 // pred_check_branch
        %126 = sbr.rel (%p124) target = $region16
      $region15: #{tpu_custom_call.1} parent=5 // pred_region
        // Predicated region
        $region17: #{tpu_custom_call.1} parent=15 // pred_check
          %p127 = pneg %p48
        $region18: #{tpu_custom_call.1} parent=15 // pred_check_branch
          %129 = sbr.rel (%p127) target = $region20
        $region19: #{tpu_custom_call.1} parent=15 // pred_region
          %s130 = sand.u32 %s38, 1
          %s131 = scalar_lea.sflag [#allocation6], %s130
          %s132 = sand.u32 %s38, 1
          %s133 = smul.addr %s132, 8
          %s134 = scalar_lea.vmem [#allocation5], %s133
          %136 = vsyncadd %s131, 0
          %s137 = smul.addr %s21, 4
          %s138 = sadd.s32 %s22, %s137
          %s139 = smul.addr %s138, 2
          %s140 = scalar_lea.hbm %s0, %s139
          %s141 = sshll.u32 %s140, 4
          %s142 = int_to_ptr.hbm [resolvable:$true] %s141
          %s143 = sshll.u32 %s134, 4
          %s144 = int_to_ptr.vmem [resolvable:$true] %s143
          %149 = dma.hbm_to_vmem [thread:$0]  %s142, 128, %s144, %s131, 32, 32, 2
        $region20: #{tpu_custom_call.1} parent=15 // pred_fallthru
          _
        // Predicated region
        $region21: #{tpu_custom_call.1} parent=15 // pred_check
          %p150 = pneg %p76
        $region22: #{tpu_custom_call.1} parent=15 // pred_check_branch
          %152 = sbr.rel (%p150) target = $region24
        $region23: #{tpu_custom_call.1} parent=15 // pred_region
          %s153 = sand.u32 %s66, 1
          %s154 = scalar_lea.sflag [#allocation8], %s153
          %s155 = sand.u32 %s66, 1
          %s156 = smul.addr %s155, 2
          %s157 = scalar_lea.vmem [#allocation7], %s156
          %159 = vsyncadd %s154, 0
          %s160 = sadd.s32 %s22, %s21
          %s161 = smul.addr %s160, 2
          %s162 = scalar_lea.hbm %s1, %s161
          %s164 = sshll.u32 %s162, 4
          %s165 = int_to_ptr.hbm [resolvable:$true] %s164
          %s166 = sshll.u32 %s157, 4
          %s167 = int_to_ptr.vmem [resolvable:$true] %s166
          %169 = dma.hbm_to_vmem [thread:$0]  %s165, 32, %s167, %s154
        $region24: #{tpu_custom_call.1} parent=15 // pred_fallthru
          _
      $region16: #{tpu_custom_call.1} parent=5 // pred_fallthru
        _
      %p170 = scmp.le.s32.totalorder 1, %s14
      %p171 = scmp.lt.s32.totalorder %s14, 3
      %p172 = pnand %p170, %p171
      %p173 = pneg %p172
      // Predicated region
      $region25: #{tpu_custom_call.1} parent=5 // pred_check
        _
      $region26: #{tpu_custom_call.1} parent=5 // pred_check_branch
        %175 = sbr.rel (%p172) target = $region28
      $region27: #{tpu_custom_call.1} parent=5 // pred_region
        %s176 = ssub.s32 %s14, 1
        %s177 = sand.u32 %s41, 1
        %s178 = scalar_lea.sflag [#allocation6], %s177
        %s179 = sand.u32 %s41, 1
        %s180 = smul.addr %s179, 8
        %s181 = scalar_lea.vmem [#allocation5], %s180
        // Predicated region
        $region29: #{tpu_custom_call.1} parent=27 // pred_check
          %p182 = pneg %p54
        $region30: #{tpu_custom_call.1} parent=27 // pred_check_branch
          %184 = sbr.rel (%p182) target = $region32
        $region31: #{tpu_custom_call.1} parent=27 // pred_region
          %186 = dma.done %s178, 128
        $region32: #{tpu_custom_call.1} parent=27 // pred_fallthru
          _
        %s187 = sand.u32 %s69, 1
        %s188 = scalar_lea.sflag [#allocation8], %s187
        %s189 = sand.u32 %s69, 1
        %s190 = smul.addr %s189, 2
        %s191 = scalar_lea.vmem [#allocation7], %s190
        // Predicated region
        $region33: #{tpu_custom_call.1} parent=27 // pred_check
          %p192 = pneg %p82
        $region34: #{tpu_custom_call.1} parent=27 // pred_check_branch
          %194 = sbr.rel (%p192) target = $region36
        $region35: #{tpu_custom_call.1} parent=27 // pred_region
          %196 = dma.done %s188, 32
        $region36: #{tpu_custom_call.1} parent=27 // pred_fallthru
          _
        %s197 = sand.u32 %s41, 1
        %s198 = scalar_lea.sflag [#allocation6], %s197
        %s199 = sand.u32 %s41, 1
        %s200 = smul.addr %s199, 8
        %s201 = scalar_lea.vmem [#allocation5], %s200
        %p202 = pneg %p54
        %p203 = pneg %p51
        %s204 = sand.u32 %s69, 1
        %s205 = scalar_lea.sflag [#allocation8], %s204
        %s206 = sand.u32 %s69, 1
        %s207 = smul.addr %s206, 2
        %s208 = scalar_lea.vmem [#allocation7], %s207
        %p209 = pneg %p82
        %p210 = pneg %p79
        %p211 = pneg %p108
        %p212 = pneg %p105
        %p213 = scmp.lt.s32.totalorder %s23, 1
        %s214 = scalar_select %p213, %s23, 1
        %s215 = smul.addr %s214, 4
        %s216 = scalar_lea.vmem %s2, %s215
        %p217 = scmp.lt.s32.totalorder %s23, 1
        %s218 = scalar_select %p217, %s23, 1
        %s219 = smul.addr %s218, 4
        %s220 = scalar_lea.vmem %s2, %s219
        %p221 = scmp.eq.s32.totalorder %s24, 0
        // Predicated region
        $region37: #{tpu_custom_call.1} parent=27 // pred_check
          %p222 = pneg %p221
        $region38: #{tpu_custom_call.1} parent=27 // pred_check_branch
          %224 = sbr.rel (%p222) target = $region40
        $region39: #{tpu_custom_call.1} parent=27 // pred_region
          %225 = vst [vmem:[#allocation2] sm:$0xf] 0.0
          %226 = vst [vmem:[#allocation3] sm:$0xf] 0.0
          %227 = vst [vmem:[#allocation4] sm:$0xf] 0.0
        $region40: #{tpu_custom_call.1} parent=27 // pred_fallthru
          _
        %v228 = vld [vmem:[%s191] sm:$0x3]
        %v229 = vld [vmem:[%s181] sm:$0x3]
        %s230 = scalar_lea.vmem %s181, 2 [#allocation5]
        %v231 = vld [vmem:[%s230] sm:$0x3]
        %s232 = scalar_lea.vmem %s181, 4 [#allocation5]
        %v233 = vld [vmem:[%s232] sm:$0x3]
        %s234 = scalar_lea.vmem %s181, 6 [#allocation5]
        %v235 = vld [vmem:[%s234] sm:$0x3]
        %v236 = vmax.f32 %v229, %v231
        %v237 = vmax.f32 %v236, %v233
        %v238 = vmax.f32 %v237, %v235
        %v239 = vsub.f32 %v229, %v238
        %v240 = vmul.f32 %v239, 1.442695
        %v241 = vpow.pop %v240
        %v242 = vsub.f32 %v231, %v238
        %v243 = vmul.f32 %v242, 1.442695
        %v244 = vpow.pop %v243
        %v245 = vsub.f32 %v233, %v238
        %v246 = vmul.f32 %v245, 1.442695
        %v247 = vpow.pop %v246
        %v248 = vsub.f32 %v235, %v238
        %v249 = vmul.f32 %v248, 1.442695
        %v250 = vpow.pop %v249
        %v251 = vadd.f32 %v241, %v244
        %v252 = vadd.f32 %v251, %v247
        %v253 = vadd.f32 %v252, %v250
        %v254 = vrcp.pop %v253
        %v255 = vmul.f32 %v241, %v254
        %v256 = vmul.f32 %v244, %v254
        %v257 = vmul.f32 %v247, %v254
        %v258 = vmul.f32 %v250, %v254
        %vm259 = vcmp.eq.s32.totalorder %v228, 0
        %v260 = vsel %vm259, 1, 0
        %v261 = vcvt.s32.f32 %v260
        %v262 = vmul.f32 %v255, %v261
        %vm263 = vcmask 1041408
        %v264 = vsel %vm263, %v262, 0.0
        %v265 = vrot.slane %v264, 4
        %v266 = vadd.f32 %v264, %v265
        %v267 = vrot.slane %v266, 2
        %v268 = vadd.f32 %v266, %v267
        %v269 = vrot.slane %v268, 1
        %v270 = vadd.f32 %v268, %v269
        %v271 = vsel %vm263, %v261, 0.0
        %v272 = vrot.slane %v271, 4
        %v273 = vadd.f32 %v271, %v272
        %v274 = vrot.slane %v273, 2
        %v275 = vadd.f32 %v273, %v274
        %v276 = vrot.slane %v275, 1
        %v277 = vadd.f32 %v275, %v276
        %v278 = vmul.f32 %v255, %v255
        %v279 = vsel %vm263, %v278, 0.0
        %v280 = vrot.slane %v279, 4
        %v281 = vadd.f32 %v279, %v280
        %v282 = vrot.slane %v281, 2
        %v283 = vadd.f32 %v281, %v282
        %v284 = vrot.slane %v283, 1
        %v285 = vadd.f32 %v283, %v284
        %vm286 = vcmp.eq.s32.totalorder %v228, 1
        %v287 = vsel %vm286, 1, 0
        %v288 = vcvt.s32.f32 %v287
        %v289 = vmul.f32 %v256, %v288
        %v290 = vsel %vm263, %v289, 0.0
        %v291 = vrot.slane %v290, 4
        %v292 = vadd.f32 %v290, %v291
        %v293 = vrot.slane %v292, 2
        %v294 = vadd.f32 %v292, %v293
        %v295 = vrot.slane %v294, 1
        %v296 = vadd.f32 %v294, %v295
        %v297 = vsel %vm263, %v288, 0.0
        %v298 = vrot.slane %v297, 4
        %v299 = vadd.f32 %v297, %v298
        %v300 = vrot.slane %v299, 2
        %v301 = vadd.f32 %v299, %v300
        %v302 = vrot.slane %v301, 1
        %v303 = vadd.f32 %v301, %v302
        %v304 = vmul.f32 %v256, %v256
        %v305 = vsel %vm263, %v304, 0.0
        %v306 = vrot.slane %v305, 4
        %v307 = vadd.f32 %v305, %v306
        %v308 = vrot.slane %v307, 2
        %v309 = vadd.f32 %v307, %v308
        %v310 = vrot.slane %v309, 1
        %v311 = vadd.f32 %v309, %v310
        %vm312 = vcmp.eq.s32.totalorder %v228, 2
        %v313 = vsel %vm312, 1, 0
        %v314 = vcvt.s32.f32 %v313
        %v315 = vmul.f32 %v257, %v314
        %v316 = vsel %vm263, %v315, 0.0
        %v317 = vrot.slane %v316, 4
        %v318 = vadd.f32 %v316, %v317
        %v319 = vrot.slane %v318, 2
        %v320 = vadd.f32 %v318, %v319
        %v321 = vrot.slane %v320, 1
        %v322 = vadd.f32 %v320, %v321
        %v323 = vsel %vm263, %v314, 0.0
        %v324 = vrot.slane %v323, 4
        %v325 = vadd.f32 %v323, %v324
        %v326 = vrot.slane %v325, 2
        %v327 = vadd.f32 %v325, %v326
        %v328 = vrot.slane %v327, 1
        %v329 = vadd.f32 %v327, %v328
        %v330 = vmul.f32 %v257, %v257
        %v331 = vsel %vm263, %v330, 0.0
        %v332 = vrot.slane %v331, 4
        %v333 = vadd.f32 %v331, %v332
        %v334 = vrot.slane %v333, 2
        %v335 = vadd.f32 %v333, %v334
        %v336 = vrot.slane %v335, 1
        %v337 = vadd.f32 %v335, %v336
        %vm338 = vcmp.eq.s32.totalorder %v228, 3
        %v339 = vsel %vm338, 1, 0
        %v340 = vcvt.s32.f32 %v339
        %v341 = vmul.f32 %v258, %v340
        %v342 = vsel %vm263, %v341, 0.0
        %v343 = vrot.slane %v342, 4
        %v344 = vadd.f32 %v342, %v343
        %v345 = vrot.slane %v344, 2
        %v346 = vadd.f32 %v344, %v345
        %v347 = vrot.slane %v346, 1
        %v348 = vadd.f32 %v346, %v347
        %v349 = vsel %vm263, %v340, 0.0
        %v350 = vrot.slane %v349, 4
        %v351 = vadd.f32 %v349, %v350
        %v352 = vrot.slane %v351, 2
        %v353 = vadd.f32 %v351, %v352
        %v354 = vrot.slane %v353, 1
        %v355 = vadd.f32 %v353, %v354
        %v356 = vmul.f32 %v258, %v258
        %v357 = vsel %vm263, %v356, 0.0
        %v358 = vrot.slane %v357, 4
        %v359 = vadd.f32 %v357, %v358
        %v360 = vrot.slane %v359, 2
        %v361 = vadd.f32 %v359, %v360
        %v362 = vrot.slane %v361, 1
        %v363 = vadd.f32 %v361, %v362
        %v364 = vld [vmem:[#allocation2] sm:$0xf]
        %vm365 = vcmask 1040384
        %v366 = vsel %vm365, %v270, %v296
        %v367 = vsel %vm263, %v366, %v322
        %vm368 = vcmask 1042432
        %v369 = vsel %vm368, %v367, %v348
        %v370 = vadd.f32 %v364, %v369
        %371 = vst [vmem:[#allocation2] sm:$0xf] %v370
        %v372 = vld [vmem:[#allocation3] sm:$0xf]
        %v373 = vsel %vm365, %v277, %v303
        %v374 = vsel %vm263, %v373, %v329
        %v375 = vsel %vm368, %v374, %v355
        %v376 = vadd.f32 %v372, %v375
        %377 = vst [vmem:[#allocation3] sm:$0xf] %v376
        %v378 = vld [vmem:[#allocation4] sm:$0xf]
        %v379 = vsel %vm365, %v285, %v311
        %v380 = vsel %vm263, %v379, %v337
        %v381 = vsel %vm368, %v380, %v363
        %v382 = vadd.f32 %v378, %v381
        %383 = vst [vmem:[#allocation4] sm:$0xf] %v382
        // Predicated region
        $region41: #{tpu_custom_call.1} parent=27 // pred_check
          %p384 = pneg %p221
        $region42: #{tpu_custom_call.1} parent=27 // pred_check_branch
          %386 = sbr.rel (%p384) target = $region44
        $region43: #{tpu_custom_call.1} parent=27 // pred_region
          %v387 = vld [vmem:[#allocation2] sm:$0xf]
          %vm388 = vcmask 1043456
          %v389 = vsel %vm388, %v387, 0.0
          %390 = vadd.xlane.f32.xlu0 %v389
          %v391 = vpop.xlane.xlu0 %390
          %v392 = vld [vmem:[#allocation3] sm:$0xf]
          %v393 = vsel %vm388, %v392, 0.0
          %394 = vadd.xlane.f32.xlu0 %v393
          %v395 = vpop.xlane.xlu0 %394
          %v396 = vld [vmem:[#allocation4] sm:$0xf]
          %v397 = vsel %vm388, %v396, 0.0
          %398 = vadd.xlane.f32.xlu0 %v397
          %v399 = vpop.xlane.xlu0 %398
          %vm400 = vcmask 7168
          %v401 = vsel %vm400, %v391, %v395
          %vm402 = vcmask 15360
          %v403 = vsel %vm402, %v401, %v399
          %vm404 = vcmask 19456
          %405 = vst.msk [vmem:[%s220] sm:$0xf] %vm404, %v403
        $region44: #{tpu_custom_call.1} parent=27 // pred_fallthru
          _
        %p406 = scmp.lt.s32.totalorder %s23, 1
        %s407 = scalar_select %p406, %s23, 1
        %s408 = smul.addr %s407, 4
        %s409 = scalar_lea.vmem %s2, %s408
        // Predicated region
        $region45: #{tpu_custom_call.1} parent=27 // pred_check
          %p410 = pneg %p105
        $region46: #{tpu_custom_call.1} parent=27 // pred_check_branch
          %412 = sbr.rel (%p410) target = $region48
        $region47: #{tpu_custom_call.1} parent=27 // pred_region
          _
        $region48: #{tpu_custom_call.1} parent=27 // pred_fallthru
          _
      $region28: #{tpu_custom_call.1} parent=5 // pred_fallthru
        _
      %p413 = scmp.le.s32.totalorder 2, %s14
      // Predicated region
      $region49: #{tpu_custom_call.1} parent=5 // pred_check
        %p414 = pneg %p413
      $region50: #{tpu_custom_call.1} parent=5 // pred_check_branch
        %416 = sbr.rel (%p414) target = $region52
      $region51: #{tpu_custom_call.1} parent=5 // pred_region
        %s417 = ssub.s32 %s14, 2
        // Predicated region
        $region53: #{tpu_custom_call.1} parent=51 // pred_check
          %p418 = pneg %p111
        $region54: #{tpu_custom_call.1} parent=51 // pred_check_branch
          %420 = sbr.rel (%p418) target = $region56
        $region55: #{tpu_custom_call.1} parent=51 // pred_region
          %p421 = scmp.lt.s32.totalorder %s25, 1
          %s422 = scalar_select %p421, %s25, 1
          %s423 = smul.addr %s422, 4
          %s424 = scalar_lea.vmem %s2, %s423
        $region56: #{tpu_custom_call.1} parent=51 // pred_fallthru
          _
      $region52: #{tpu_custom_call.1} parent=5 // pred_fallthru
        _
    $region6: #{tpu_custom_call.1} parent=1 // loop_footer
      %s18 = sadd.s32 1, %s14
    $region7: #{tpu_custom_call.1} parent=1 // loop_footer_branch
      %13 = sbr.rel target = $region3
    $region8: #{tpu_custom_call.1} parent=1 // loop_exit
      _
    %425 = vsyncpa [#allocation6], 1
    %s426 = scalar_lea.sflag [#allocation6], 1
    %427 = vsyncpa %s426, 1
    %428 = vsyncpa [#allocation8], 1
    %s429 = scalar_lea.sflag [#allocation8], 1
    %430 = vsyncpa %s429, 1

</llo_original>
